<compile_context>
chip_gen: v7x
topology: tpu7x:2x2x1
jax: 0.10.0
libtpu: 0.0.40
codegen_flags: <defaults>
</compile_context>

<pallas_src>
import jax
import jax.numpy as jnp
from jax.experimental import pallas as pl
from jax.experimental.pallas import tpu as pltpu

IN_DIM = 8 * 3   # 24
H_DIM = 50
OUT_DIM = 20

_LANE = 128            # TPU lane width
_TB_MAX = 16384        # max batch rows per grid step (~7 MB VMEM incl. buffers)
_VMEM_LIMIT = 48 * 1024 * 1024


def _round_up(n, m):
    return (n + m - 1) // m * m


def _cdiv(a, b):
    return -(-a // b)


def _mlp_kernel(x_ref, w1_ref, b1_ref, w2_ref, b2_ref, w3_ref, b3_ref, o_ref):
    # Lane-dense layout: batch lives in the lane (last) dim.
    # x_ref: [24, TB] f32, wK: [out, in] (bf16 or f32), bK: [out, 1] f32,
    # o_ref: [20, TB] f32.
    cdt = w1_ref.dtype                       # bf16 (MXU-native) or f32
    x = x_ref[...].astype(cdt)               # cast only at the dot input
    h1 = jnp.dot(w1_ref[...], x, preferred_element_type=jnp.float32) + b1_ref[...]
    h1 = jnp.maximum(h1, 0.0).astype(cdt)    # ReLU in f32, store/feed next dot in bf16
    h2 = jnp.dot(w2_ref[...], h1, preferred_element_type=jnp.float32) + b2_ref[...]
    h2 = jnp.maximum(h2, 0.0).astype(cdt)
    y = jnp.dot(w3_ref[...], h2, preferred_element_type=jnp.float32) + b3_ref[...]
    o_ref[...] = y.astype(o_ref.dtype)


def _pick_tb(b_pad128, tb):
    """Pick a lane-aligned batch tile: big (<= _TB_MAX), balanced across tiles,
    and split into >=2 grid steps when possible so v7x's two TensorCores both
    get work on the "parallel" batch axis."""
    if tb is not None:
        return _round_up(tb, _LANE)
    min_tiles = 2 if b_pad128 >= 2 * _LANE else 1
    n_tiles = max(_cdiv(b_pad128, _TB_MAX), min_tiles)
    return _round_up(_cdiv(b_pad128, n_tiles), _LANE)


def dlcm_hex_8_3_forward_fm(x_fm, params, *, tb=None, use_bf16=True):
    """Feature-major entry point (preferred: no wrapper transpose passes).
    x_fm: [24, B] float32.
    params: w1 [50,24], b1 [50,1], w2 [50,50], b2 [50,1], w3 [20,50], b3 [20,1].
    Returns [20, B] float32."""
    B = x_fm.shape[1]
    b_pad128 = _round_up(max(B, 1), _LANE)
    tb = _pick_tb(b_pad128, tb)
    b_pad = _round_up(B, tb)
    if b_pad != B:
        x_fm = jnp.pad(x_fm, ((0, 0), (0, b_pad - B)))

    wdt = jnp.bfloat16 if use_bf16 else jnp.float32
    w1 = params["w1"].astype(wdt)
    w2 = params["w2"].astype(wdt)
    w3 = params["w3"].astype(wdt)
    b1, b2, b3 = params["b1"], params["b2"], params["b3"]

    const = lambda i: (0, 0)
    out_fm = pl.pallas_call(
        _mlp_kernel,
        out_shape=jax.ShapeDtypeStruct((OUT_DIM, b_pad), jnp.float32),
        grid=(b_pad // tb,),
        in_specs=[
            pl.BlockSpec((IN_DIM, tb), lambda i: (0, i)),   # x: new tile / step
            pl.BlockSpec((H_DIM, IN_DIM), const),            # w1 (VMEM-resident)
            pl.BlockSpec((H_DIM, 1), const),                 # b1
            pl.BlockSpec((H_DIM, H_DIM), const),             # w2
            pl.BlockSpec((H_DIM, 1), const),                 # b2
            pl.BlockSpec((OUT_DIM, H_DIM), const),           # w3
            pl.BlockSpec((OUT_DIM, 1), const),               # b3
        ],
        out_specs=pl.BlockSpec((OUT_DIM, tb), lambda i: (0, i)),
        compiler_params=pltpu.CompilerParams(
            dimension_semantics=("parallel",),
            vmem_limit_bytes=_VMEM_LIMIT,
        ),
    )(x_fm, w1, b1, w2, b2, w3, b3)

    return out_fm[:, :B] if b_pad != B else out_fm


def dlcm_hex_8_3_forward(x, params, *, tb=None, use_bf16=True):
    """PyTorch-interface compat wrapper: x [B, 24] -> [B, 20].
    Callers that can keep activations feature-major should use
    dlcm_hex_8_3_forward_fm directly to skip these two transpose passes."""
    return dlcm_hex_8_3_forward_fm(x.T, params, tb=tb, use_bf16=use_bf16).T


def init_params(key):
    """Deterministic init matching PyTorch nn.Linear default:
    U(-1/sqrt(fan_in), 1/sqrt(fan_in)) for weight [out, in] and bias [out, 1]."""
    keys = jax.random.split(key, 6)

    def linear(kw, kb, fan_in, fan_out):
        bound = 1.0 / jnp.sqrt(jnp.float32(fan_in))
        w = jax.random.uniform(kw, (fan_out, fan_in), jnp.float32, -bound, bound)
        b = jax.random.uniform(kb, (fan_out, 1), jnp.float32, -bound, bound)
        return w, b

    w1, b1 = linear(keys[0], keys[1], IN_DIM, H_DIM)
    w2, b2 = linear(keys[2], keys[3], H_DIM, H_DIM)
    w3, b3 = linear(keys[4], keys[5], H_DIM, OUT_DIM)
    return {"w1": w1, "b1": b1, "w2": w2, "b2": b2, "w3": w3, "b3": b3}


def reference_forward(x, p):
    h1 = jnp.maximum(x @ p["w1"].T + p["b1"].T, 0.0)
    h2 = jnp.maximum(h1 @ p["w2"].T + p["b2"].T, 0.0)
    return h2 @ p["w3"].T + p["b3"].T


if __name__ == "__main__":
    key = jax.random.PRNGKey(0)
    k_params, k_x, k_x2 = jax.random.split(key, 3)
    params = init_params(k_params)

    # Small smoke test: batch of 8 flattened hex inputs (8 elements x 3 feats).
    x = jax.random.normal(k_x, (8, IN_DIM), jnp.float32)
    ref = reference_forward(x, params)

    # 1) full-f32 path: tight check of layout / structure correctness.
    out_f32 = jax.block_until_ready(
        dlcm_hex_8_3_forward(x, params, use_bf16=False))
    assert out_f32.shape == (8, OUT_DIM)
    assert jnp.allclose(out_f32, ref, atol=1e-4, rtol=1e-4)

    # 2) bf16-MXU path (default): looser tolerance vs. the f32 reference.
    out_bf16 = jax.block_until_ready(dlcm_hex_8_3_forward(x, params))
    assert out_bf16.shape == (8, OUT_DIM)
    assert jnp.allclose(out_bf16, ref, atol=5e-2, rtol=5e-2)

    # 3) multi-block grid + batch padding + feature-major entry point.
    x2 = jax.random.normal(k_x2, (300, IN_DIM), jnp.float32)
    ref2 = reference_forward(x2, params)
    out2_fm = jax.block_until_ready(
        dlcm_hex_8_3_forward_fm(x2.T, params, tb=128))
    out2 = out2_fm.T
    assert out2.shape == (300, OUT_DIM)
    assert jnp.allclose(out2, ref2, atol=5e-2, rtol=5e-2)

    # 4) default tile picker on a mid-size batch (>=2 parallel grid steps).
    out3 = jax.block_until_ready(dlcm_hex_8_3_forward(x2, params))
    assert out3.shape == (300, OUT_DIM)
    assert jnp.allclose(out3, ref2, atol=5e-2, rtol=5e-2)

    print("KERNEL_OK")
</pallas_src>

<mosaic_0001>
module attributes {stable_mosaic.version = 11 : i64} {
  func.func @_mlp_kernel(%arg0: i32, %arg1: memref<24x128xf32, #tpu.memory_space<vmem>>, %arg2: memref<50x24xf32, #tpu.memory_space<vmem>>, %arg3: memref<50x1xf32, #tpu.memory_space<vmem>>, %arg4: memref<50x50xf32, #tpu.memory_space<vmem>>, %arg5: memref<50x1xf32, #tpu.memory_space<vmem>>, %arg6: memref<20x50xf32, #tpu.memory_space<vmem>>, %arg7: memref<20x1xf32, #tpu.memory_space<vmem>>, %arg8: memref<20x128xf32, #tpu.memory_space<vmem>>) attributes {dimension_semantics = [#tpu.dimension_semantics<parallel>], iteration_bounds = array<i64: 1>, scalar_prefetch = 0 : i64, scratch_operands = 0 : i64, tpu.core_type = #tpu.core_type<tc>, window_params = [{transform_indices = @transform_0, window_bounds = array<i64: 24, 128>}, {pipeline_mode = #tpu.pipeline_mode<synchronous>, transform_indices = @transform_1, window_bounds = array<i64: 50, 24>}, {pipeline_mode = #tpu.pipeline_mode<synchronous>, transform_indices = @transform_2, window_bounds = array<i64: 50, 1>}, {pipeline_mode = #tpu.pipeline_mode<synchronous>, transform_indices = @transform_3, window_bounds = array<i64: 50, 50>}, {pipeline_mode = #tpu.pipeline_mode<synchronous>, transform_indices = @transform_4, window_bounds = array<i64: 50, 1>}, {pipeline_mode = #tpu.pipeline_mode<synchronous>, transform_indices = @transform_5, window_bounds = array<i64: 20, 50>}, {pipeline_mode = #tpu.pipeline_mode<synchronous>, transform_indices = @transform_6, window_bounds = array<i64: 20, 1>}, {transform_indices = @transform_7, window_bounds = array<i64: 20, 128>}]} {
    %c0 = arith.constant 0 : index
    %c0_0 = arith.constant 0 : index
    %0 = vector.load %arg1[%c0, %c0_0] : memref<24x128xf32, #tpu.memory_space<vmem>>, vector<24x128xf32>
    %c0_1 = arith.constant 0 : index
    %c0_2 = arith.constant 0 : index
    %1 = vector.load %arg2[%c0_1, %c0_2] : memref<50x24xf32, #tpu.memory_space<vmem>>, vector<50x24xf32>
    %cst = arith.constant dense<0.000000e+00> : vector<50x128xf32>
    %2 = tpu.matmul %1, %0, %cst {dimension_numbers = #tpu.dot_dimension_numbers<[1], [0], [0], [1], [0, 0, 1, 1], [], []>} : vector<50x24xf32>, vector<24x128xf32>, vector<50x128xf32> -> vector<50x128xf32>
    %c0_3 = arith.constant 0 : index
    %c0_4 = arith.constant 0 : index
    %3 = vector.load %arg3[%c0_3, %c0_4] : memref<50x1xf32, #tpu.memory_space<vmem>>, vector<50x1xf32>
    %4 = vector.broadcast %3 : vector<50x1xf32> to vector<50x128xf32>
    %5 = arith.addf %2, %4 : vector<50x128xf32>
    %cst_5 = arith.constant 0.000000e+00 : f32
    %6 = vector.broadcast %cst_5 : f32 to vector<50x128xf32>
    %7 = arith.maximumf %5, %6 : vector<50x128xf32>
    %c0_6 = arith.constant 0 : index
    %c0_7 = arith.constant 0 : index
    %8 = vector.load %arg4[%c0_6, %c0_7] : memref<50x50xf32, #tpu.memory_space<vmem>>, vector<50x50xf32>
    %cst_8 = arith.constant dense<0.000000e+00> : vector<50x128xf32>
    %9 = tpu.matmul %8, %7, %cst_8 {dimension_numbers = #tpu.dot_dimension_numbers<[1], [0], [0], [1], [0, 0, 1, 1], [], []>} : vector<50x50xf32>, vector<50x128xf32>, vector<50x128xf32> -> vector<50x128xf32>
    %c0_9 = arith.constant 0 : index
    %c0_10 = arith.constant 0 : index
    %10 = vector.load %arg5[%c0_9, %c0_10] : memref<50x1xf32, #tpu.memory_space<vmem>>, vector<50x1xf32>
    %11 = vector.broadcast %10 : vector<50x1xf32> to vector<50x128xf32>
    %12 = arith.addf %9, %11 : vector<50x128xf32>
    %cst_11 = arith.constant 0.000000e+00 : f32
    %13 = vector.broadcast %cst_11 : f32 to vector<50x128xf32>
    %14 = arith.maximumf %12, %13 : vector<50x128xf32>
    %c0_12 = arith.constant 0 : index
    %c0_13 = arith.constant 0 : index
    %15 = vector.load %arg6[%c0_12, %c0_13] : memref<20x50xf32, #tpu.memory_space<vmem>>, vector<20x50xf32>
    %cst_14 = arith.constant dense<0.000000e+00> : vector<20x128xf32>
    %16 = tpu.matmul %15, %14, %cst_14 {dimension_numbers = #tpu.dot_dimension_numbers<[1], [0], [0], [1], [0, 0, 1, 1], [], []>} : vector<20x50xf32>, vector<50x128xf32>, vector<20x128xf32> -> vector<20x128xf32>
    %c0_15 = arith.constant 0 : index
    %c0_16 = arith.constant 0 : index
    %17 = vector.load %arg7[%c0_15, %c0_16] : memref<20x1xf32, #tpu.memory_space<vmem>>, vector<20x1xf32>
    %18 = vector.broadcast %17 : vector<20x1xf32> to vector<20x128xf32>
    %19 = arith.addf %16, %18 : vector<20x128xf32>
    %c0_17 = arith.constant 0 : index
    %c0_18 = arith.constant 0 : index
    %20 = vector.load %arg8[%c0_17, %c0_18] : memref<20x128xf32, #tpu.memory_space<vmem>>, vector<20x128xf32>
    tpu.vector_store %arg8[%c0_17, %c0_18], %19 {strides = array<i32>} : memref<20x128xf32, #tpu.memory_space<vmem>>, vector<20x128xf32>,
    return
  }
  func.func @transform_0(%arg0: i32) -> (i32, i32) {
    %c0_i32 = arith.constant 0 : i32
    %c0_i32_0 = arith.constant 0 : i32
    return %c0_i32, %arg0 : i32, i32
  }
  func.func @transform_1(%arg0: i32) -> (i32, i32) {
    %c0_i32 = arith.constant 0 : i32
    %c0_i32_0 = arith.constant 0 : i32
    %c0_i32_1 = arith.constant 0 : i32
    return %c0_i32, %c0_i32_0 : i32, i32
  }
  func.func @transform_2(%arg0: i32) -> (i32, i32) {
    %c0_i32 = arith.constant 0 : i32
    %c0_i32_0 = arith.constant 0 : i32
    %c0_i32_1 = arith.constant 0 : i32
    return %c0_i32, %c0_i32_0 : i32, i32
  }
  func.func @transform_3(%arg0: i32) -> (i32, i32) {
    %c0_i32 = arith.constant 0 : i32
    %c0_i32_0 = arith.constant 0 : i32
    %c0_i32_1 = arith.constant 0 : i32
    return %c0_i32, %c0_i32_0 : i32, i32
  }
  func.func @transform_4(%arg0: i32) -> (i32, i32) {
    %c0_i32 = arith.constant 0 : i32
    %c0_i32_0 = arith.constant 0 : i32
    %c0_i32_1 = arith.constant 0 : i32
    return %c0_i32, %c0_i32_0 : i32, i32
  }
  func.func @transform_5(%arg0: i32) -> (i32, i32) {
    %c0_i32 = arith.constant 0 : i32
    %c0_i32_0 = arith.constant 0 : i32
    %c0_i32_1 = arith.constant 0 : i32
    return %c0_i32, %c0_i32_0 : i32, i32
  }
  func.func @transform_6(%arg0: i32) -> (i32, i32) {
    %c0_i32 = arith.constant 0 : i32
    %c0_i32_0 = arith.constant 0 : i32
    %c0_i32_1 = arith.constant 0 : i32
    return %c0_i32, %c0_i32_0 : i32, i32
  }
  func.func @transform_7(%arg0: i32) -> (i32, i32) {
    %c0_i32 = arith.constant 0 : i32
    %c0_i32_0 = arith.constant 0 : i32
    return %c0_i32, %arg0 : i32, i32
  }
}

</mosaic_0001>

<llo_original>
// kernel: tpu_custom_call.1
$region0: #{tpu_custom_call.1}
  #allocation0 [shape = 'u32[]', space=smem, size = 0x4, offset = 0x4, fixed_abs, tag = 'smem constant byte address 0x4 - core index']
  #allocation1 [shape = 'u32[144,128]{1,0:T(1,128)}', space=vmem, size = 0x12000, scoped, tag = 'internal scratch']
  %s0 = inlined_call_operand.vmem [shape: f32[24,128], index: 0, kind: input, shape index: {}]
  %s1 = inlined_call_operand.vmem [shape: f32[50,24], index: 1, kind: input, shape index: {}]
  %s2 = inlined_call_operand.vmem [shape: f32[50,1], index: 2, kind: input, shape index: {}]
  %s3 = inlined_call_operand.vmem [shape: f32[50,50], index: 3, kind: input, shape index: {}]
  %s4 = inlined_call_operand.vmem [shape: f32[50,1], index: 4, kind: input, shape index: {}]
  %s5 = inlined_call_operand.vmem [shape: f32[20,50], index: 5, kind: input, shape index: {}]
  %s6 = inlined_call_operand.vmem [shape: f32[20,1], index: 6, kind: input, shape index: {}]
  %s7 = inlined_call_operand.hbm [shape: f32[20,128], index: 7, kind: output, shape index: {}]
  %s8 = sld [smem:[#allocation0]]
  $region38: #{tpu_custom_call.1} parent=0
    _
  %s10 = ssub.s32 1, %s8
  %s11 = scalar_select 0, %s10, %s8
  $region1: #{tpu_custom_call.1} parent=0
    #allocation2 [shape = 'u8[12288]{0}', space=vmem, size = 0x3000, scoped, tag = 'output window, operand 0, single buffered']
    #allocation3 [shape = 's32[1]{0}', space=sflag, size = 0x4, scoped, tag = 'scoped memory for tpu_custom_call.1']
    %12 = vsyncpa [#allocation3], 0
    // Predicated region
    $region2: #{tpu_custom_call.1} parent=1 // pred_check
      _
    $region3: #{tpu_custom_call.1} parent=1 // pred_check_branch
      %14 = sbr.rel (0) target = $region5
    $region4: #{tpu_custom_call.1} parent=1 // pred_region
      _
    $region5: #{tpu_custom_call.1} parent=1 // pred_fallthru
      _
    // Predicated region
    $region6: #{tpu_custom_call.1} parent=1 // pred_check
      _
    $region7: #{tpu_custom_call.1} parent=1 // pred_check_branch
      %16 = sbr.rel (0) target = $region9
    $region8: #{tpu_custom_call.1} parent=1 // pred_region
      _
    $region9: #{tpu_custom_call.1} parent=1 // pred_fallthru
      _
    // Predicated region
    $region10: #{tpu_custom_call.1} parent=1 // pred_check
      _
    $region11: #{tpu_custom_call.1} parent=1 // pred_check_branch
      %18 = sbr.rel (0) target = $region13
    $region12: #{tpu_custom_call.1} parent=1 // pred_region
      _
    $region13: #{tpu_custom_call.1} parent=1 // pred_fallthru
      _
    // Predicated region
    $region14: #{tpu_custom_call.1} parent=1 // pred_check
      _
    $region15: #{tpu_custom_call.1} parent=1 // pred_check_branch
      %20 = sbr.rel (0) target = $region17
    $region16: #{tpu_custom_call.1} parent=1 // pred_region
      _
    $region17: #{tpu_custom_call.1} parent=1 // pred_fallthru
      _
    // Predicated region
    $region18: #{tpu_custom_call.1} parent=1 // pred_check
      _
    $region19: #{tpu_custom_call.1} parent=1 // pred_check_branch
      %22 = sbr.rel (0) target = $region21
    $region20: #{tpu_custom_call.1} parent=1 // pred_region
      _
    $region21: #{tpu_custom_call.1} parent=1 // pred_fallthru
      _
    // Predicated region
    $region22: #{tpu_custom_call.1} parent=1 // pred_check
      _
    $region23: #{tpu_custom_call.1} parent=1 // pred_check_branch
      %24 = sbr.rel (0) target = $region25
    $region24: #{tpu_custom_call.1} parent=1 // pred_region
      _
    $region25: #{tpu_custom_call.1} parent=1 // pred_fallthru
      _
    // Predicated region
    $region26: #{tpu_custom_call.1} parent=1 // pred_check
      _
    $region27: #{tpu_custom_call.1} parent=1 // pred_check_branch
      %26 = sbr.rel (0) target = $region29
    $region28: #{tpu_custom_call.1} parent=1 // pred_region
      _
    $region29: #{tpu_custom_call.1} parent=1 // pred_fallthru
      _
    %v27 = vld [vmem:[%s0] sm:$0xff]
    %v28 = vld [vmem:[%s0 + $0x8] sm:$0xff]
    %v29 = vld [vmem:[%s0 + $0x10] sm:$0xff]
    %v30 = vld [vmem:[%s1] sm:$0xff]
    %v31 = vld [vmem:[%s1 + $0x8] sm:$0xff]
    %v32 = vld [vmem:[%s1 + $0x10] sm:$0xff]
    %v33 = vld [vmem:[%s1 + $0x18] sm:$0xff]
    %v34 = vld [vmem:[%s1 + $0x20] sm:$0xff]
    %v35 = vld [vmem:[%s1 + $0x28] sm:$0xff]
    %v36 = vld [vmem:[%s1 + $0x30] sm:$0x3]
    %v37 = vld [vmem:[%s2] sm:$0xff]
    %v38 = vld [vmem:[%s2 + $0x8] sm:$0xff]
    %v39 = vld [vmem:[%s2 + $0x10] sm:$0xff]
    %v40 = vld [vmem:[%s2 + $0x18] sm:$0xff]
    %v41 = vld [vmem:[%s2 + $0x20] sm:$0xff]
    %v42 = vld [vmem:[%s2 + $0x28] sm:$0xff]
    %v43 = vld [vmem:[%s2 + $0x30] sm:$0x3]
    %45 = vset.pattern.permute.xlu0 0
    %46 = vperm.xlu0 %45, %v37
    %v47 = vpop.permute.xlu0 %46
    %50 = vset.pattern.permute.xlu0 0
    %51 = vperm.xlu0 %50, %v38
    %v52 = vpop.permute.xlu0 %51
    %55 = vset.pattern.permute.xlu0 0
    %56 = vperm.xlu0 %55, %v39
    %v57 = vpop.permute.xlu0 %56
    %60 = vset.pattern.permute.xlu0 0
    %61 = vperm.xlu0 %60, %v40
    %v62 = vpop.permute.xlu0 %61
    %65 = vset.pattern.permute.xlu0 0
    %66 = vperm.xlu0 %65, %v41
    %v67 = vpop.permute.xlu0 %66
    %70 = vset.pattern.permute.xlu0 0
    %71 = vperm.xlu0 %70, %v42
    %v72 = vpop.permute.xlu0 %71
    %75 = vset.pattern.permute.xlu0 0
    %76 = vperm.xlu0 %75, %v43
    %v77 = vpop.permute.xlu0 %76
    %vm79 = vcmask 195584
    %v81 = vsel %vm79, %v30, 0
    %v84 = vsel %vm79, %v31, 0
    %v87 = vsel %vm79, %v32, 0
    %v90 = vsel %vm79, %v33, 0
    %v93 = vsel %vm79, %v34, 0
    %v96 = vsel %vm79, %v35, 0
    %v99 = vsel %vm79, %v36, 0
    %101 = vmatprep.subr.mxu0 0.0
    %102 = vmatpush1.msra.mxu0 %v27
    %103 = vmatprep.subr.mxu0 0.0
    %104 = vmatpush1.msra.mxu0 %v28
    %105 = vmatprep.subr.mxu0 0.0
    %106 = vmatpush1.msra.mxu0 %v29
    %107 = vmatprep.subr.mxu0 0.0
    %108 = vmatpush1.msra.mxu0 0.0
    %109 = vmatprep.subr.mxu0 0.0
    %110 = vmatpush1.msra.mxu0 0.0
    %111 = vmatprep.subr.mxu0 0.0
    %112 = vmatpush1.msra.mxu0 0.0
    %113 = vmatprep.subr.mxu0 0.0
    %114 = vmatpush1.msra.mxu0 0.0
    %115 = vmatprep.subr.mxu0 0.0
    %116 = vmatpush1.msra.mxu0 0.0
    %117 = vmatprep.subr.mxu0 0.0
    %118 = vmatpush1.msra.mxu0 0.0
    %119 = vmatprep.subr.mxu0 0.0
    %120 = vmatpush1.msra.mxu0 0.0
    %121 = vmatprep.subr.mxu0 0.0
    %122 = vmatpush1.msra.mxu0 0.0
    %123 = vmatprep.subr.mxu0 0.0
    %124 = vmatpush1.msra.mxu0 0.0
    %125 = vmatprep.subr.mxu0 0.0
    %126 = vmatpush1.msra.mxu0 0.0
    %127 = vmatprep.subr.mxu0 0.0
    %128 = vmatpush1.msra.mxu0 0.0
    %129 = vmatprep.subr.mxu0 0.0
    %130 = vmatpush1.msra.mxu0 0.0
    %131 = vmatprep.subr.mxu0 0.0
    %132 = vmatpush1.msra.mxu0 0.0
    %133 = vmatprep.subr.mxu0 0.0
    %134 = vmatpush1.msra.mxu0 0.0
    %135 = vmatprep.subr.mxu0 0.0
    %136 = vmatpush1.msra.mxu0 0.0
    %137 = vmatprep.subr.mxu0 0.0
    %138 = vmatpush1.msra.mxu0 0.0
    %139 = vmatprep.subr.mxu0 0.0
    %140 = vmatpush1.msra.mxu0 0.0
    %141 = vmatprep.subr.mxu0 0.0
    %142 = vmatpush1.msra.mxu0 0.0
    %143 = vmatprep.subr.mxu0 0.0
    %144 = vmatpush1.msra.mxu0 0.0
    %145 = vmatprep.subr.mxu0 0.0
    %146 = vmatpush1.msra.mxu0 0.0
    %147 = vmatprep.subr.mxu0 0.0
    %148 = vmatpush1.msra.mxu0 0.0
    %149 = vmatprep.subr.mxu0 0.0
    %150 = vmatpush1.msra.mxu0 0.0
    %151 = vmatprep.subr.mxu0 0.0
    %152 = vmatpush1.msra.mxu0 0.0
    %153 = vmatprep.subr.mxu0 0.0
    %154 = vmatpush1.msra.mxu0 0.0
    %155 = vmatprep.subr.mxu0 0.0
    %156 = vmatpush1.msra.mxu0 0.0
    %157 = vmatprep.subr.mxu0 0.0
    %158 = vmatpush1.msra.mxu0 0.0
    %159 = vmatprep.subr.mxu0 0.0
    %160 = vmatpush1.msra.mxu0 0.0
    %161 = vmatprep.subr.mxu0 0.0
    %162 = vmatpush1.msra.mxu0 0.0
    %163 = vmatprep.subr.mxu0 0.0
    %164 = vmatpush1.msra.mxu0 0.0
    %165 = vmatprep.mubr.f32.mxu0 0.0
    %166 = vmatmul.mubr.f32.gmra.mrb[0].mxu0 %v81
    %v167 = vpop.f32.mrb[0].mxu0
    %v168 = vadd.f32 %v47, %v167
    %v169 = vpop.f32.mrb[0].mxu0
    %170 = vmatprep.mubr.f32.mxu0 0.0
    %171 = vmatmul.mubr.f32.gmra.mrb[0].mxu0 %v84
    %v172 = vpop.f32.mrb[0].mxu0
    %v173 = vadd.f32 %v52, %v172
    %v174 = vpop.f32.mrb[0].mxu0
    %175 = vmatprep.mubr.f32.mxu0 0.0
    %176 = vmatmul.mubr.f32.gmra.mrb[0].mxu0 %v87
    %v177 = vpop.f32.mrb[0].mxu0
    %v178 = vadd.f32 %v57, %v177
    %v179 = vpop.f32.mrb[0].mxu0
    %180 = vmatprep.mubr.f32.mxu0 0.0
    %181 = vmatmul.mubr.f32.gmra.mrb[0].mxu0 %v90
    %v182 = vpop.f32.mrb[0].mxu0
    %v183 = vadd.f32 %v62, %v182
    %v184 = vpop.f32.mrb[0].mxu0
    %185 = vmatprep.mubr.f32.mxu0 0.0
    %186 = vmatmul.mubr.f32.gmra.mrb[0].mxu0 %v93
    %v187 = vpop.f32.mrb[0].mxu0
    %v188 = vadd.f32 %v67, %v187
    %v189 = vpop.f32.mrb[0].mxu0
    %190 = vmatprep.mubr.f32.mxu0 0.0
    %191 = vmatmul.mubr.f32.gmra.mrb[0].mxu0 %v96
    %v192 = vpop.f32.mrb[0].mxu0
    %v193 = vadd.f32 %v72, %v192
    %v194 = vpop.f32.mrb[0].mxu0
    %195 = vmatprep.mubr.f32.mxu0 0.0
    %196 = vmatmul.mubr.f32.gmra.mrb[0].mxu0 %v99
    %v197 = vpop.f32.mrb[0].mxu0
    %v198 = vadd.f32 %v77, %v197
    %v199 = vpop.f32.mrb[0].mxu0
    %200 = vdwg.mxu0
    %v201 = vmax.f32 %v168, 0.0
    %v202 = vmax.f32 %v173, 0.0
    %v203 = vmax.f32 %v178, 0.0
    %v204 = vmax.f32 %v183, 0.0
    %v205 = vmax.f32 %v188, 0.0
    %v206 = vmax.f32 %v193, 0.0
    %v207 = vmax.f32 %v198, 0.0
    %v208 = vld [vmem:[%s3] sm:$0xff]
    %v209 = vld [vmem:[%s3 + $0x8] sm:$0xff]
    %v210 = vld [vmem:[%s3 + $0x10] sm:$0xff]
    %v211 = vld [vmem:[%s3 + $0x18] sm:$0xff]
    %v212 = vld [vmem:[%s3 + $0x20] sm:$0xff]
    %v213 = vld [vmem:[%s3 + $0x28] sm:$0xff]
    %v214 = vld [vmem:[%s3 + $0x30] sm:$0x3]
    %v215 = vld [vmem:[%s4] sm:$0xff]
    %v216 = vld [vmem:[%s4 + $0x8] sm:$0xff]
    %v217 = vld [vmem:[%s4 + $0x10] sm:$0xff]
    %v218 = vld [vmem:[%s4 + $0x18] sm:$0xff]
    %v219 = vld [vmem:[%s4 + $0x20] sm:$0xff]
    %v220 = vld [vmem:[%s4 + $0x28] sm:$0xff]
    %v221 = vld [vmem:[%s4 + $0x30] sm:$0x3]
    %223 = vset.pattern.permute.xlu0 0
    %224 = vperm.xlu0 %223, %v215
    %v225 = vpop.permute.xlu0 %224
    %228 = vset.pattern.permute.xlu0 0
    %229 = vperm.xlu0 %228, %v216
    %v230 = vpop.permute.xlu0 %229
    %233 = vset.pattern.permute.xlu0 0
    %234 = vperm.xlu0 %233, %v217
    %v235 = vpop.permute.xlu0 %234
    %238 = vset.pattern.permute.xlu0 0
    %239 = vperm.xlu0 %238, %v218
    %v240 = vpop.permute.xlu0 %239
    %243 = vset.pattern.permute.xlu0 0
    %244 = vperm.xlu0 %243, %v219
    %v245 = vpop.permute.xlu0 %244
    %248 = vset.pattern.permute.xlu0 0
    %249 = vperm.xlu0 %248, %v220
    %v250 = vpop.permute.xlu0 %249
    %253 = vset.pattern.permute.xlu0 0
    %254 = vperm.xlu0 %253, %v221
    %v255 = vpop.permute.xlu0 %254
    %vm257 = vcmask 408576
    %v259 = vsel %vm257, %v208, 0
    %v262 = vsel %vm257, %v209, 0
    %v265 = vsel %vm257, %v210, 0
    %v268 = vsel %vm257, %v211, 0
    %v271 = vsel %vm257, %v212, 0
    %v274 = vsel %vm257, %v213, 0
    %v277 = vsel %vm257, %v214, 0
    %vm279 = vcmask 1041408
    %v281 = vsel %vm279, %v207, 0
    %283 = vmatprep.subr.mxu0 0.0
    %284 = vmatpush1.msra.mxu0 %v201
    %285 = vmatprep.subr.mxu0 0.0
    %286 = vmatpush1.msra.mxu0 %v202
    %287 = vmatprep.subr.mxu0 0.0
    %288 = vmatpush1.msra.mxu0 %v203
    %289 = vmatprep.subr.mxu0 0.0
    %290 = vmatpush1.msra.mxu0 %v204
    %291 = vmatprep.subr.mxu0 0.0
    %292 = vmatpush1.msra.mxu0 %v205
    %293 = vmatprep.subr.mxu0 0.0
    %294 = vmatpush1.msra.mxu0 %v206
    %295 = vmatprep.subr.mxu0 0.0
    %296 = vmatpush1.msra.mxu0 %v281
    %297 = vmatprep.subr.mxu0 0.0
    %298 = vmatpush1.msra.mxu0 0.0
    %299 = vmatprep.subr.mxu0 0.0
    %300 = vmatpush1.msra.mxu0 0.0
    %301 = vmatprep.subr.mxu0 0.0
    %302 = vmatpush1.msra.mxu0 0.0
    %303 = vmatprep.subr.mxu0 0.0
    %304 = vmatpush1.msra.mxu0 0.0
    %305 = vmatprep.subr.mxu0 0.0
    %306 = vmatpush1.msra.mxu0 0.0
    %307 = vmatprep.subr.mxu0 0.0
    %308 = vmatpush1.msra.mxu0 0.0
    %309 = vmatprep.subr.mxu0 0.0
    %310 = vmatpush1.msra.mxu0 0.0
    %311 = vmatprep.subr.mxu0 0.0
    %312 = vmatpush1.msra.mxu0 0.0
    %313 = vmatprep.subr.mxu0 0.0
    %314 = vmatpush1.msra.mxu0 0.0
    %315 = vmatprep.subr.mxu0 0.0
    %316 = vmatpush1.msra.mxu0 0.0
    %317 = vmatprep.subr.mxu0 0.0
    %318 = vmatpush1.msra.mxu0 0.0
    %319 = vmatprep.subr.mxu0 0.0
    %320 = vmatpush1.msra.mxu0 0.0
    %321 = vmatprep.subr.mxu0 0.0
    %322 = vmatpush1.msra.mxu0 0.0
    %323 = vmatprep.subr.mxu0 0.0
    %324 = vmatpush1.msra.mxu0 0.0
    %325 = vmatprep.subr.mxu0 0.0
    %326 = vmatpush1.msra.mxu0 0.0
    %327 = vmatprep.subr.mxu0 0.0
    %328 = vmatpush1.msra.mxu0 0.0
    %329 = vmatprep.subr.mxu0 0.0
    %330 = vmatpush1.msra.mxu0 0.0
    %331 = vmatprep.subr.mxu0 0.0
    %332 = vmatpush1.msra.mxu0 0.0
    %333 = vmatprep.subr.mxu0 0.0
    %334 = vmatpush1.msra.mxu0 0.0
    %335 = vmatprep.subr.mxu0 0.0
    %336 = vmatpush1.msra.mxu0 0.0
    %337 = vmatprep.subr.mxu0 0.0
    %338 = vmatpush1.msra.mxu0 0.0
    %339 = vmatprep.subr.mxu0 0.0
    %340 = vmatpush1.msra.mxu0 0.0
    %341 = vmatprep.subr.mxu0 0.0
    %342 = vmatpush1.msra.mxu0 0.0
    %343 = vmatprep.subr.mxu0 0.0
    %344 = vmatpush1.msra.mxu0 0.0
    %345 = vmatprep.subr.mxu0 0.0
    %346 = vmatpush1.msra.mxu0 0.0
    %347 = vmatprep.mubr.f32.mxu0 0.0
    %348 = vmatmul.mubr.f32.gmra.mrb[0].mxu0 %v259
    %v349 = vpop.f32.mrb[0].mxu0
    %v350 = vadd.f32 %v225, %v349
    %v351 = vpop.f32.mrb[0].mxu0
    %352 = vmatprep.mubr.f32.mxu0 0.0
    %353 = vmatmul.mubr.f32.gmra.mrb[0].mxu0 %v262
    %v354 = vpop.f32.mrb[0].mxu0
    %v355 = vadd.f32 %v230, %v354
    %v356 = vpop.f32.mrb[0].mxu0
    %357 = vmatprep.mubr.f32.mxu0 0.0
    %358 = vmatmul.mubr.f32.gmra.mrb[0].mxu0 %v265
    %v359 = vpop.f32.mrb[0].mxu0
    %v360 = vadd.f32 %v235, %v359
    %v361 = vpop.f32.mrb[0].mxu0
    %362 = vmatprep.mubr.f32.mxu0 0.0
    %363 = vmatmul.mubr.f32.gmra.mrb[0].mxu0 %v268
    %v364 = vpop.f32.mrb[0].mxu0
    %v365 = vadd.f32 %v240, %v364
    %v366 = vpop.f32.mrb[0].mxu0
    %367 = vmatprep.mubr.f32.mxu0 0.0
    %368 = vmatmul.mubr.f32.gmra.mrb[0].mxu0 %v271
    %v369 = vpop.f32.mrb[0].mxu0
    %v370 = vadd.f32 %v245, %v369
    %v371 = vpop.f32.mrb[0].mxu0
    %372 = vmatprep.mubr.f32.mxu0 0.0
    %373 = vmatmul.mubr.f32.gmra.mrb[0].mxu0 %v274
    %v374 = vpop.f32.mrb[0].mxu0
    %v375 = vadd.f32 %v250, %v374
    %v376 = vpop.f32.mrb[0].mxu0
    %377 = vmatprep.mubr.f32.mxu0 0.0
    %378 = vmatmul.mubr.f32.gmra.mrb[0].mxu0 %v277
    %v379 = vpop.f32.mrb[0].mxu0
    %v380 = vadd.f32 %v255, %v379
    %v381 = vpop.f32.mrb[0].mxu0
    %382 = vdwg.mxu0
    %v383 = vmax.f32 %v350, 0.0
    %v384 = vmax.f32 %v355, 0.0
    %v385 = vmax.f32 %v360, 0.0
    %v386 = vmax.f32 %v365, 0.0
    %v387 = vmax.f32 %v370, 0.0
    %v388 = vmax.f32 %v375, 0.0
    %v389 = vmax.f32 %v380, 0.0
    %v390 = vld [vmem:[%s5] sm:$0xff]
    %v391 = vld [vmem:[%s5 + $0x8] sm:$0xff]
    %v392 = vld [vmem:[%s5 + $0x10] sm:$0xf]
    %v393 = vld [vmem:[%s6] sm:$0xff]
    %v394 = vld [vmem:[%s6 + $0x8] sm:$0xff]
    %v395 = vld [vmem:[%s6 + $0x10] sm:$0xf]
    %397 = vset.pattern.permute.xlu0 0
    %398 = vperm.xlu0 %397, %v393
    %v399 = vpop.permute.xlu0 %398
    %402 = vset.pattern.permute.xlu0 0
    %403 = vperm.xlu0 %402, %v394
    %v404 = vpop.permute.xlu0 %403
    %407 = vset.pattern.permute.xlu0 0
    %408 = vperm.xlu0 %407, %v395
    %v409 = vpop.permute.xlu0 %408
    %v412 = vsel %vm257, %v390, 0
    %v415 = vsel %vm257, %v391, 0
    %v418 = vsel %vm257, %v392, 0
    %v421 = vsel %vm279, %v389, 0
    %423 = vmatprep.subr.mxu0 0.0
    %424 = vmatpush1.msra.mxu0 %v383
    %425 = vmatprep.subr.mxu0 0.0
    %426 = vmatpush1.msra.mxu0 %v384
    %427 = vmatprep.subr.mxu0 0.0
    %428 = vmatpush1.msra.mxu0 %v385
    %429 = vmatprep.subr.mxu0 0.0
    %430 = vmatpush1.msra.mxu0 %v386
    %431 = vmatprep.subr.mxu0 0.0
    %432 = vmatpush1.msra.mxu0 %v387
    %433 = vmatprep.subr.mxu0 0.0
    %434 = vmatpush1.msra.mxu0 %v388
    %435 = vmatprep.subr.mxu0 0.0
    %436 = vmatpush1.msra.mxu0 %v421
    %437 = vmatprep.subr.mxu0 0.0
    %438 = vmatpush1.msra.mxu0 0.0
    %439 = vmatprep.subr.mxu0 0.0
    %440 = vmatpush1.msra.mxu0 0.0
    %441 = vmatprep.subr.mxu0 0.0
    %442 = vmatpush1.msra.mxu0 0.0
    %443 = vmatprep.subr.mxu0 0.0
    %444 = vmatpush1.msra.mxu0 0.0
    %445 = vmatprep.subr.mxu0 0.0
    %446 = vmatpush1.msra.mxu0 0.0
    %447 = vmatprep.subr.mxu0 0.0
    %448 = vmatpush1.msra.mxu0 0.0
    %449 = vmatprep.subr.mxu0 0.0
    %450 = vmatpush1.msra.mxu0 0.0
    %451 = vmatprep.subr.mxu0 0.0
    %452 = vmatpush1.msra.mxu0 0.0
    %453 = vmatprep.subr.mxu0 0.0
    %454 = vmatpush1.msra.mxu0 0.0
    %455 = vmatprep.subr.mxu0 0.0
    %456 = vmatpush1.msra.mxu0 0.0
    %457 = vmatprep.subr.mxu0 0.0
    %458 = vmatpush1.msra.mxu0 0.0
    %459 = vmatprep.subr.mxu0 0.0
    %460 = vmatpush1.msra.mxu0 0.0
    %461 = vmatprep.subr.mxu0 0.0
    %462 = vmatpush1.msra.mxu0 0.0
    %463 = vmatprep.subr.mxu0 0.0
    %464 = vmatpush1.msra.mxu0 0.0
    %465 = vmatprep.subr.mxu0 0.0
    %466 = vmatpush1.msra.mxu0 0.0
    %467 = vmatprep.subr.mxu0 0.0
    %468 = vmatpush1.msra.mxu0 0.0
    %469 = vmatprep.subr.mxu0 0.0
    %470 = vmatpush1.msra.mxu0 0.0
    %471 = vmatprep.subr.mxu0 0.0
    %472 = vmatpush1.msra.mxu0 0.0
    %473 = vmatprep.subr.mxu0 0.0
    %474 = vmatpush1.msra.mxu0 0.0
    %475 = vmatprep.subr.mxu0 0.0
    %476 = vmatpush1.msra.mxu0 0.0
    %477 = vmatprep.subr.mxu0 0.0
    %478 = vmatpush1.msra.mxu0 0.0
    %479 = vmatprep.subr.mxu0 0.0
    %480 = vmatpush1.msra.mxu0 0.0
    %481 = vmatprep.subr.mxu0 0.0
    %482 = vmatpush1.msra.mxu0 0.0
    %483 = vmatprep.subr.mxu0 0.0
    %484 = vmatpush1.msra.mxu0 0.0
    %485 = vmatprep.subr.mxu0 0.0
    %486 = vmatpush1.msra.mxu0 0.0
    %487 = vmatprep.mubr.f32.mxu0 0.0
    %488 = vmatmul.mubr.f32.gmra.mrb[0].mxu0 %v412
    %v489 = vpop.f32.mrb[0].mxu0
    %v490 = vadd.f32 %v399, %v489
    %v491 = vpop.f32.mrb[0].mxu0
    %492 = vmatprep.mubr.f32.mxu0 0.0
    %493 = vmatmul.mubr.f32.gmra.mrb[0].mxu0 %v415
    %v494 = vpop.f32.mrb[0].mxu0
    %v495 = vadd.f32 %v404, %v494
    %v496 = vpop.f32.mrb[0].mxu0
    %497 = vmatprep.mubr.f32.mxu0 0.0
    %498 = vmatmul.mubr.f32.gmra.mrb[0].mxu0 %v418
    %v499 = vpop.f32.mrb[0].mxu0
    %v500 = vadd.f32 %v409, %v499
    %v501 = vpop.f32.mrb[0].mxu0
    %502 = vdwg.mxu0
    %503 = vst [vmem:[#allocation2] sm:$0xff] %v490
    %504 = vst [vmem:[#allocation2 + $0x8] sm:$0xff] %v495
    %505 = vst [vmem:[#allocation2 + $0x10] sm:$0xf] %v500
    // Predicated region
    $region30: #{tpu_custom_call.1} parent=1 // pred_check
      _
    $region31: #{tpu_custom_call.1} parent=1 // pred_check_branch
      %507 = sbr.rel (0) target = $region33
    $region32: #{tpu_custom_call.1} parent=1 // pred_region
      %s509 = ssub.s32 384, 384
      %510 = vsyncadd [#allocation3], %s509
      %s511 = sshll.u32 [#allocation2], 4
      %s512 = int_to_ptr.vmem [resolvable:$true] %s511
      %517 = dma.vmem_to_hbm [thread:$0]  %s512, 384, %s7, [#allocation3], 128, 128, 8
    $region33: #{tpu_custom_call.1} parent=1 // pred_fallthru
      _
    // Predicated region
    $region34: #{tpu_custom_call.1} parent=1 // pred_check
      _
    $region35: #{tpu_custom_call.1} parent=1 // pred_check_branch
      %519 = sbr.rel (0) target = $region37
    $region36: #{tpu_custom_call.1} parent=1 // pred_region
      %520 = dma.done [#allocation3], 384
    $region37: #{tpu_custom_call.1} parent=1 // pred_fallthru
      _
    %521 = vsyncpa [#allocation3], 1

</llo_original>
